<compile_context>
chip_gen: v7x
topology: tpu7x:2x2x1
jax: 0.10.0
libtpu: 0.0.40
codegen_flags: <defaults>
</compile_context>

<pallas_src>
import functools

import jax
import jax.numpy as jnp
from jax import lax
from jax.experimental import pallas as pl
from jax.experimental.pallas import tpu as pltpu


def _make_morph_kernel(op_type, *, Bt, C, Ot, k, H, W, Hp, Wp):
    assert op_type in ("dilation2d", "erosion2d")
    pb = (k - 1) // 2
    BtWp = Bt * Wp
    Lout = BtWp - (k - 1)
    is_dilation = op_type == "dilation2d"
    init_val = float("-inf") if is_dilation else float("inf")

    def kernel(w_ref, x_ref, o_ref, pk_ref, acc_ref):
        # w_ref  : SMEM (O*C*k*k,)      flat morphological weights
        # x_ref  : VMEM (Bt, C, H, W)   unpadded input block
        # o_ref  : VMEM (Bt, Ot, H, W)  output block
        # pk_ref : VMEM (C, Hp, Bt*Wp)  zero-padded input, batches packed along lanes
        # acc_ref: VMEM (Ot, H, Lout)   running max/min accumulators
        o_base = pl.program_id(1) * Ot

        # Build the zero-padded, lane-packed input in VMEM (padding handled in-kernel).
        pk_ref[...] = jnp.zeros((C, Hp, BtWp), jnp.float32)
        for b in range(Bt):
            col = b * Wp + pb
            pk_ref[:, pb:pb + H, col:col + W] = x_ref[b].astype(jnp.float32)

        # Init accumulators: -inf for dilation (max), +inf for erosion (min).
        acc_ref[...] = jnp.full((Ot, H, Lout), init_val, jnp.float32)

        # c (fori) -> kh, kw (unrolled k*k) -> o (fori, innermost over the shared patch).
        def c_body(c, carry):
            for kh in range(k):
                row = pk_ref[c, kh:kh + H, :]               # (H, Bt*Wp) read from ref
                for kw in range(k):
                    patch = row[:, kw:kw + Lout]            # (H, Lout): one lane shift, reused by all o
                    widx0 = ((o_base * C + c) * k + kh) * k + kw

                    def o_body(o, _):
                        wv = w_ref[widx0 + o * (C * k * k)]
                        if is_dilation:
                            acc_ref[o] = jnp.maximum(acc_ref[o], patch + wv)
                        else:
                            # erosion: -max(w - x) == min(x - w)  (no final negate needed)
                            acc_ref[o] = jnp.minimum(acc_ref[o], patch - wv)
                        return 0

                    lax.fori_loop(0, Ot, o_body, 0)
            return carry

        lax.fori_loop(0, C, c_body, 0)

        # Epilogue: unpack lanes back to per-batch (H, W) tiles and store.
        for b in range(Bt):
            c0 = b * Wp
            for o in range(Ot):
                o_ref[b, o, :, :] = acc_ref[o, :, c0:c0 + W].astype(o_ref.dtype)

    return kernel


def _pick_tiles(B, C, O, H, W, k, itemsize):
    """Choose (Bt, Ot): pack as many batch elems into lanes as fit a v7x-safe VMEM budget."""
    pad = k - 1
    Hp, Wp = H + pad, W + pad
    budget = 16 * 1024 * 1024   # per-step working-set budget (conservative for v7x's 64 MiB VMEM)
    Bt = 1
    for bt in range(1, B + 1):
        if B % bt:
            continue
        if bt * Wp > 2048:
            break
        lout = bt * Wp - pad
        need = (4 * (C * Hp * bt * Wp + O * H * lout)          # scratch (packed input + acc)
                + 2 * itemsize * bt * C * H * W                 # double-buffered input block
                + 2 * itemsize * bt * O * H * W)                # double-buffered output block
        if need <= budget:
            Bt = bt
    # Second 'parallel' grid axis over output channels so v7x's 2 TensorCores both get work
    # when there is only one batch tile; keep the grid coarse otherwise (v5e/v6e: 1 TC).
    Ot = O
    if B // Bt == 1 and O % 2 == 0 and O > 1:
        Ot = O // 2
    return Bt, Ot


@functools.partial(jax.jit, static_argnames=("op_type",))
def morphology(x, weight, op_type):
    """x: (B, C, H, W); weight: (O, C, k, k); returns (B, O, H, W)."""
    B, C, H, W = x.shape
    O, Cw, k, k2 = weight.shape
    assert Cw == C and k == k2

    pad = k - 1
    Hp, Wp = H + pad, W + pad
    Bt, Ot = _pick_tiles(B, C, O, H, W, k, x.dtype.itemsize)
    Lout = Bt * Wp - pad

    w_flat = weight.reshape(-1).astype(jnp.float32)   # 1-D SMEM layout

    kernel = _make_morph_kernel(op_type, Bt=Bt, C=C, Ot=Ot, k=k, H=H, W=W, Hp=Hp, Wp=Wp)

    return pl.pallas_call(
        kernel,
        out_shape=jax.ShapeDtypeStruct((B, O, H, W), x.dtype),
        grid=(B // Bt, O // Ot),
        in_specs=[
            pl.BlockSpec(memory_space=pltpu.MemorySpace.SMEM),             # flat weights
            pl.BlockSpec((Bt, C, H, W), lambda b, oi: (b, 0, 0, 0)),       # raw (unpadded) input
        ],
        out_specs=pl.BlockSpec((Bt, Ot, H, W), lambda b, oi: (b, oi, 0, 0)),
        scratch_shapes=[
            pltpu.VMEM((C, Hp, Bt * Wp), jnp.float32),   # padded, lane-packed input
            pltpu.VMEM((Ot, H, Lout), jnp.float32),      # accumulators
        ],
        compiler_params=pltpu.CompilerParams(
            dimension_semantics=("parallel", "parallel"),
            vmem_limit_bytes=48 * 1024 * 1024,
        ),
    )(w_flat, x)


def morphology_ref(x, weight, op_type):
    """Pure-JAX reference reproducing the PyTorch unfold-based forward."""
    B, C, H, W = x.shape
    O, _, k, _ = weight.shape
    pad_total = k - 1
    pb = pad_total // 2
    pe = pad_total - pb
    xpad = jnp.pad(x, ((0, 0), (0, 0), (pb, pe), (pb, pe)))
    # unfold ordering: (c, kh, kw) with kw fastest -- same as weight.view(O,-1)
    patches = jnp.stack(
        [xpad[:, :, kh:kh + H, kw:kw + W] for kh in range(k) for kw in range(k)],
        axis=2,
    )  # (B, C, k*k, H, W)
    patches = patches.reshape(B, C * k * k, H, W)
    wf = weight.reshape(O, C * k * k)
    if op_type == "dilation2d":
        vals = wf[None, :, :, None, None] + patches[:, None]
        return jnp.max(vals, axis=2)
    else:
        vals = wf[None, :, :, None, None] - patches[:, None]
        return -jnp.max(vals, axis=2)


if __name__ == "__main__":
    B, C, H, W = 2, 4, 16, 16
    O, k = 4, 3

    key = jax.random.PRNGKey(0)
    kx, kw = jax.random.split(key)
    x = jax.random.normal(kx, (B, C, H, W), dtype=jnp.float32)
    # nn.Parameter shape (out_channels, in_channels, k, k); __init__ uses zeros,
    # but we initialize deterministically non-zero to exercise the weight path.
    weight = jax.random.normal(kw, (O, C, k, k), dtype=jnp.float32) * 0.1

    ok = True
    for op_type in ("dilation2d", "erosion2d"):
        out = morphology(x, weight, op_type)
        out = jax.block_until_ready(out)
        ref = morphology_ref(x, weight, op_type)
        if out.shape != (B, O, H, W):
            ok = False
        if not jnp.allclose(out, ref, atol=1e-5, rtol=1e-5):
            ok = False

    if ok:
        print("KERNEL_OK")
    else:
        print("KERNEL_MISMATCH")
</pallas_src>

<mosaic_0001>
module attributes {stable_mosaic.version = 11 : i64} {
  func.func @kernel(%arg0: i32, %arg1: i32, %arg2: memref<144xf32, #tpu.memory_space<smem>>, %arg3: memref<2x4x16x16xf32, #tpu.memory_space<vmem>>, %arg4: memref<2x2x16x16xf32, #tpu.memory_space<vmem>>, %arg5: memref<4x18x36xf32, #tpu.memory_space<vmem>>, %arg6: memref<2x16x34xf32, #tpu.memory_space<vmem>>) attributes {dimension_semantics = [#tpu.dimension_semantics<parallel>, #tpu.dimension_semantics<parallel>], iteration_bounds = array<i64: 1, 2>, scalar_prefetch = 0 : i64, scratch_operands = 2 : i64, tpu.core_type = #tpu.core_type<tc>, window_params = [{transform_indices = @transform_0, window_bounds = array<i64: 144>}, {transform_indices = @transform_1, window_bounds = array<i64: 2, 4, 16, 16>}, {transform_indices = @transform_2, window_bounds = array<i64: 2, 2, 16, 16>}]} {
    %c2_i32 = arith.constant 2 : i32
    %0 = arith.muli %arg1, %c2_i32 : i32
    %cst = arith.constant 0.000000e+00 : f32
    %1 = vector.broadcast %cst : f32 to vector<4x18x36xf32>
    %c0 = arith.constant 0 : index
    %c0_0 = arith.constant 0 : index
    %c0_1 = arith.constant 0 : index
    %2 = vector.load %arg5[%c0, %c0_0, %c0_1] : memref<4x18x36xf32, #tpu.memory_space<vmem>>, vector<4x18x36xf32>
    tpu.vector_store %arg5[%c0, %c0_0, %c0_1], %1 {strides = array<i32>} : memref<4x18x36xf32, #tpu.memory_space<vmem>>, vector<4x18x36xf32>,
    %c0_2 = arith.constant 0 : index
    %c0_3 = arith.constant 0 : index
    %c0_4 = arith.constant 0 : index
    %c0_5 = arith.constant 0 : index
    %3 = vector.load %arg3[%c0_2, %c0_3, %c0_4, %c0_5] : memref<2x4x16x16xf32, #tpu.memory_space<vmem>>, vector<1x4x16x16xf32>
    %4 = vector.shape_cast %3 : vector<1x4x16x16xf32> to vector<4x16x16xf32>
    %c0_6 = arith.constant 0 : index
    %c1 = arith.constant 1 : index
    %c1_7 = arith.constant 1 : index
    %5 = vector.load %arg5[%c0_6, %c1, %c1_7] : memref<4x18x36xf32, #tpu.memory_space<vmem>>, vector<4x16x16xf32>
    tpu.vector_store %arg5[%c0_6, %c1, %c1_7], %4 {strides = array<i32>} : memref<4x18x36xf32, #tpu.memory_space<vmem>>, vector<4x16x16xf32>,
    %c1_8 = arith.constant 1 : index
    %c0_9 = arith.constant 0 : index
    %c0_10 = arith.constant 0 : index
    %c0_11 = arith.constant 0 : index
    %6 = vector.load %arg3[%c1_8, %c0_9, %c0_10, %c0_11] : memref<2x4x16x16xf32, #tpu.memory_space<vmem>>, vector<1x4x16x16xf32>
    %7 = vector.shape_cast %6 : vector<1x4x16x16xf32> to vector<4x16x16xf32>
    %c0_12 = arith.constant 0 : index
    %c1_13 = arith.constant 1 : index
    %c19 = arith.constant 19 : index
    %8 = vector.load %arg5[%c0_12, %c1_13, %c19] : memref<4x18x36xf32, #tpu.memory_space<vmem>>, vector<4x16x16xf32>
    tpu.vector_store %arg5[%c0_12, %c1_13, %c19], %7 {strides = array<i32>} : memref<4x18x36xf32, #tpu.memory_space<vmem>>, vector<4x16x16xf32>,
    %cst_14 = arith.constant 0xFF800000 : f32
    %9 = vector.broadcast %cst_14 : f32 to vector<2x16x34xf32>
    %c0_15 = arith.constant 0 : index
    %c0_16 = arith.constant 0 : index
    %c0_17 = arith.constant 0 : index
    %10 = vector.load %arg6[%c0_15, %c0_16, %c0_17] : memref<2x16x34xf32, #tpu.memory_space<vmem>>, vector<2x16x34xf32>
    tpu.vector_store %arg6[%c0_15, %c0_16, %c0_17], %9 {strides = array<i32>} : memref<2x16x34xf32, #tpu.memory_space<vmem>>, vector<2x16x34xf32>,
    %c0_i32 = arith.constant 0 : i32
    %c4_i32 = arith.constant 4 : i32
    %11 = arith.addi %c0_i32, %c4_i32 : i32
    %c1_i32 = arith.constant 1 : i32
    scf.for %arg7 = %c0_i32 to %11 step %c1_i32  : i32 {
      %32 = arith.index_cast %arg7 : i32 to index
      %c0_46 = arith.constant 0 : index
      %c0_47 = arith.constant 0 : index
      %33 = vector.load %arg5[%32, %c0_46, %c0_47] : memref<4x18x36xf32, #tpu.memory_space<vmem>>, vector<1x16x36xf32>
      %34 = vector.shape_cast %33 : vector<1x16x36xf32> to vector<16x36xf32>
      %35 = vector.extract_strided_slice %34 {offsets = [0, 0], sizes = [16, 34], strides = [1, 1]} : vector<16x36xf32> to vector<16x34xf32>
      %c4_i32_48 = arith.constant 4 : i32
      %36 = arith.muli %0, %c4_i32_48 : i32
      %37 = arith.addi %36, %arg7 : i32
      %c3_i32 = arith.constant 3 : i32
      %38 = arith.muli %37, %c3_i32 : i32
      %c0_i32_49 = arith.constant 0 : i32
      %39 = arith.addi %38, %c0_i32_49 : i32
      %c3_i32_50 = arith.constant 3 : i32
      %40 = arith.muli %39, %c3_i32_50 : i32
      %c0_i32_51 = arith.constant 0 : i32
      %41 = arith.addi %40, %c0_i32_51 : i32
      %c0_i32_52 = arith.constant 0 : i32
      %c2_i32_53 = arith.constant 2 : i32
      %42 = arith.addi %c0_i32_52, %c2_i32_53 : i32
      %c1_i32_54 = arith.constant 1 : i32
      scf.for %arg8 = %c0_i32_52 to %42 step %c1_i32_54  : i32 {
        %c36_i32 = arith.constant 36 : i32
        %113 = arith.muli %arg8, %c36_i32 : i32
        %114 = arith.addi %41, %113 : i32
        %115 = arith.index_cast %114 : i32 to index
        %116 = memref.load %arg2[%115] : memref<144xf32, #tpu.memory_space<smem>>
        %117 = arith.index_cast %arg8 : i32 to index
        %c0_131 = arith.constant 0 : index
        %c0_132 = arith.constant 0 : index
        %118 = vector.load %arg6[%117, %c0_131, %c0_132] : memref<2x16x34xf32, #tpu.memory_space<vmem>>, vector<1x16x34xf32>
        %119 = vector.shape_cast %118 : vector<1x16x34xf32> to vector<16x34xf32>
        %120 = vector.broadcast %116 : f32 to vector<16x34xf32>
        %121 = arith.addf %35, %120 : vector<16x34xf32>
        %122 = arith.maximumf %119, %121 : vector<16x34xf32>
        %123 = arith.index_cast %arg8 : i32 to index
        %c0_133 = arith.constant 0 : index
        %c0_134 = arith.constant 0 : index
        %124 = vector.load %arg6[%123, %c0_133, %c0_134] : memref<2x16x34xf32, #tpu.memory_space<vmem>>, vector<1x16x34xf32>
        %125 = vector.shape_cast %124 : vector<1x16x34xf32> to vector<16x34xf32>
        %126 = vector.shape_cast %122 : vector<16x34xf32> to vector<1x16x34xf32>
        tpu.vector_store %arg6[%123, %c0_133, %c0_134], %126 {strides = array<i32>} : memref<2x16x34xf32, #tpu.memory_space<vmem>>, vector<1x16x34xf32>,
      }
      %c2_i32_55 = arith.constant 2 : i32
      %43 = vector.extract_strided_slice %34 {offsets = [0, 1], sizes = [16, 34], strides = [1, 1]} : vector<16x36xf32> to vector<16x34xf32>
      %c4_i32_56 = arith.constant 4 : i32
      %44 = arith.muli %0, %c4_i32_56 : i32
      %45 = arith.addi %44, %arg7 : i32
      %c3_i32_57 = arith.constant 3 : i32
      %46 = arith.muli %45, %c3_i32_57 : i32
      %c0_i32_58 = arith.constant 0 : i32
      %47 = arith.addi %46, %c0_i32_58 : i32
      %c3_i32_59 = arith.constant 3 : i32
      %48 = arith.muli %47, %c3_i32_59 : i32
      %c1_i32_60 = arith.constant 1 : i32
      %49 = arith.addi %48, %c1_i32_60 : i32
      %c0_i32_61 = arith.constant 0 : i32
      %c2_i32_62 = arith.constant 2 : i32
      %50 = arith.addi %c0_i32_61, %c2_i32_62 : i32
      %c1_i32_63 = arith.constant 1 : i32
      scf.for %arg8 = %c0_i32_61 to %50 step %c1_i32_63  : i32 {
        %c36_i32 = arith.constant 36 : i32
        %113 = arith.muli %arg8, %c36_i32 : i32
        %114 = arith.addi %49, %113 : i32
        %115 = arith.index_cast %114 : i32 to index
        %116 = memref.load %arg2[%115] : memref<144xf32, #tpu.memory_space<smem>>
        %117 = arith.index_cast %arg8 : i32 to index
        %c0_131 = arith.constant 0 : index
        %c0_132 = arith.constant 0 : index
        %118 = vector.load %arg6[%117, %c0_131, %c0_132] : memref<2x16x34xf32, #tpu.memory_space<vmem>>, vector<1x16x34xf32>
        %119 = vector.shape_cast %118 : vector<1x16x34xf32> to vector<16x34xf32>
        %120 = vector.broadcast %116 : f32 to vector<16x34xf32>
        %121 = arith.addf %43, %120 : vector<16x34xf32>
        %122 = arith.maximumf %119, %121 : vector<16x34xf32>
        %123 = arith.index_cast %arg8 : i32 to index
        %c0_133 = arith.constant 0 : index
        %c0_134 = arith.constant 0 : index
        %124 = vector.load %arg6[%123, %c0_133, %c0_134] : memref<2x16x34xf32, #tpu.memory_space<vmem>>, vector<1x16x34xf32>
        %125 = vector.shape_cast %124 : vector<1x16x34xf32> to vector<16x34xf32>
        %126 = vector.shape_cast %122 : vector<16x34xf32> to vector<1x16x34xf32>
        tpu.vector_store %arg6[%123, %c0_133, %c0_134], %126 {strides = array<i32>} : memref<2x16x34xf32, #tpu.memory_space<vmem>>, vector<1x16x34xf32>,
      }
      %c2_i32_64 = arith.constant 2 : i32
      %51 = vector.extract_strided_slice %34 {offsets = [0, 2], sizes = [16, 34], strides = [1, 1]} : vector<16x36xf32> to vector<16x34xf32>
      %c4_i32_65 = arith.constant 4 : i32
      %52 = arith.muli %0, %c4_i32_65 : i32
      %53 = arith.addi %52, %arg7 : i32
      %c3_i32_66 = arith.constant 3 : i32
      %54 = arith.muli %53, %c3_i32_66 : i32
      %c0_i32_67 = arith.constant 0 : i32
      %55 = arith.addi %54, %c0_i32_67 : i32
      %c3_i32_68 = arith.constant 3 : i32
      %56 = arith.muli %55, %c3_i32_68 : i32
      %c2_i32_69 = arith.constant 2 : i32
      %57 = arith.addi %56, %c2_i32_69 : i32
      %c0_i32_70 = arith.constant 0 : i32
      %c2_i32_71 = arith.constant 2 : i32
      %58 = arith.addi %c0_i32_70, %c2_i32_71 : i32
      %c1_i32_72 = arith.constant 1 : i32
      scf.for %arg8 = %c0_i32_70 to %58 step %c1_i32_72  : i32 {
        %c36_i32 = arith.constant 36 : i32
        %113 = arith.muli %arg8, %c36_i32 : i32
        %114 = arith.addi %57, %113 : i32
        %115 = arith.index_cast %114 : i32 to index
        %116 = memref.load %arg2[%115] : memref<144xf32, #tpu.memory_space<smem>>
        %117 = arith.index_cast %arg8 : i32 to index
        %c0_131 = arith.constant 0 : index
        %c0_132 = arith.constant 0 : index
        %118 = vector.load %arg6[%117, %c0_131, %c0_132] : memref<2x16x34xf32, #tpu.memory_space<vmem>>, vector<1x16x34xf32>
        %119 = vector.shape_cast %118 : vector<1x16x34xf32> to vector<16x34xf32>
        %120 = vector.broadcast %116 : f32 to vector<16x34xf32>
        %121 = arith.addf %51, %120 : vector<16x34xf32>
        %122 = arith.maximumf %119, %121 : vector<16x34xf32>
        %123 = arith.index_cast %arg8 : i32 to index
        %c0_133 = arith.constant 0 : index
        %c0_134 = arith.constant 0 : index
        %124 = vector.load %arg6[%123, %c0_133, %c0_134] : memref<2x16x34xf32, #tpu.memory_space<vmem>>, vector<1x16x34xf32>
        %125 = vector.shape_cast %124 : vector<1x16x34xf32> to vector<16x34xf32>
        %126 = vector.shape_cast %122 : vector<16x34xf32> to vector<1x16x34xf32>
        tpu.vector_store %arg6[%123, %c0_133, %c0_134], %126 {strides = array<i32>} : memref<2x16x34xf32, #tpu.memory_space<vmem>>, vector<1x16x34xf32>,
      }
      %c2_i32_73 = arith.constant 2 : i32
      %59 = arith.index_cast %arg7 : i32 to index
      %c1_74 = arith.constant 1 : index
      %c0_75 = arith.constant 0 : index
      %60 = vector.load %arg5[%59, %c1_74, %c0_75] : memref<4x18x36xf32, #tpu.memory_space<vmem>>, vector<1x16x36xf32>
      %61 = vector.shape_cast %60 : vector<1x16x36xf32> to vector<16x36xf32>
      %62 = vector.extract_strided_slice %61 {offsets = [0, 0], sizes = [16, 34], strides = [1, 1]} : vector<16x36xf32> to vector<16x34xf32>
      %c4_i32_76 = arith.constant 4 : i32
      %63 = arith.muli %0, %c4_i32_76 : i32
      %64 = arith.addi %63, %arg7 : i32
      %c3_i32_77 = arith.constant 3 : i32
      %65 = arith.muli %64, %c3_i32_77 : i32
      %c1_i32_78 = arith.constant 1 : i32
      %66 = arith.addi %65, %c1_i32_78 : i32
      %c3_i32_79 = arith.constant 3 : i32
      %67 = arith.muli %66, %c3_i32_79 : i32
      %c0_i32_80 = arith.constant 0 : i32
      %68 = arith.addi %67, %c0_i32_80 : i32
      %c0_i32_81 = arith.constant 0 : i32
      %c2_i32_82 = arith.constant 2 : i32
      %69 = arith.addi %c0_i32_81, %c2_i32_82 : i32
      %c1_i32_83 = arith.constant 1 : i32
      scf.for %arg8 = %c0_i32_81 to %69 step %c1_i32_83  : i32 {
        %c36_i32 = arith.constant 36 : i32
        %113 = arith.muli %arg8, %c36_i32 : i32
        %114 = arith.addi %68, %113 : i32
        %115 = arith.index_cast %114 : i32 to index
        %116 = memref.load %arg2[%115] : memref<144xf32, #tpu.memory_space<smem>>
        %117 = arith.index_cast %arg8 : i32 to index
        %c0_131 = arith.constant 0 : index
        %c0_132 = arith.constant 0 : index
        %118 = vector.load %arg6[%117, %c0_131, %c0_132] : memref<2x16x34xf32, #tpu.memory_space<vmem>>, vector<1x16x34xf32>
        %119 = vector.shape_cast %118 : vector<1x16x34xf32> to vector<16x34xf32>
        %120 = vector.broadcast %116 : f32 to vector<16x34xf32>
        %121 = arith.addf %62, %120 : vector<16x34xf32>
        %122 = arith.maximumf %119, %121 : vector<16x34xf32>
        %123 = arith.index_cast %arg8 : i32 to index
        %c0_133 = arith.constant 0 : index
        %c0_134 = arith.constant 0 : index
        %124 = vector.load %arg6[%123, %c0_133, %c0_134] : memref<2x16x34xf32, #tpu.memory_space<vmem>>, vector<1x16x34xf32>
        %125 = vector.shape_cast %124 : vector<1x16x34xf32> to vector<16x34xf32>
        %126 = vector.shape_cast %122 : vector<16x34xf32> to vector<1x16x34xf32>
        tpu.vector_store %arg6[%123, %c0_133, %c0_134], %126 {strides = array<i32>} : memref<2x16x34xf32, #tpu.memory_space<vmem>>, vector<1x16x34xf32>,
      }
      %c2_i32_84 = arith.constant 2 : i32
      %70 = vector.extract_strided_slice %61 {offsets = [0, 1], sizes = [16, 34], strides = [1, 1]} : vector<16x36xf32> to vector<16x34xf32>
      %c4_i32_85 = arith.constant 4 : i32
      %71 = arith.muli %0, %c4_i32_85 : i32
      %72 = arith.addi %71, %arg7 : i32
      %c3_i32_86 = arith.constant 3 : i32
      %73 = arith.muli %72, %c3_i32_86 : i32
      %c1_i32_87 = arith.constant 1 : i32
      %74 = arith.addi %73, %c1_i32_87 : i32
      %c3_i32_88 = arith.constant 3 : i32
      %75 = arith.muli %74, %c3_i32_88 : i32
      %c1_i32_89 = arith.constant 1 : i32
      %76 = arith.addi %75, %c1_i32_89 : i32
      %c0_i32_90 = arith.constant 0 : i32
      %c2_i32_91 = arith.constant 2 : i32
      %77 = arith.addi %c0_i32_90, %c2_i32_91 : i32
      %c1_i32_92 = arith.constant 1 : i32
      scf.for %arg8 = %c0_i32_90 to %77 step %c1_i32_92  : i32 {
        %c36_i32 = arith.constant 36 : i32
        %113 = arith.muli %arg8, %c36_i32 : i32
        %114 = arith.addi %76, %113 : i32
        %115 = arith.index_cast %114 : i32 to index
        %116 = memref.load %arg2[%115] : memref<144xf32, #tpu.memory_space<smem>>
        %117 = arith.index_cast %arg8 : i32 to index
        %c0_131 = arith.constant 0 : index
        %c0_132 = arith.constant 0 : index
        %118 = vector.load %arg6[%117, %c0_131, %c0_132] : memref<2x16x34xf32, #tpu.memory_space<vmem>>, vector<1x16x34xf32>
        %119 = vector.shape_cast %118 : vector<1x16x34xf32> to vector<16x34xf32>
        %120 = vector.broadcast %116 : f32 to vector<16x34xf32>
        %121 = arith.addf %70, %120 : vector<16x34xf32>
        %122 = arith.maximumf %119, %121 : vector<16x34xf32>
        %123 = arith.index_cast %arg8 : i32 to index
        %c0_133 = arith.constant 0 : index
        %c0_134 = arith.constant 0 : index
        %124 = vector.load %arg6[%123, %c0_133, %c0_134] : memref<2x16x34xf32, #tpu.memory_space<vmem>>, vector<1x16x34xf32>
        %125 = vector.shape_cast %124 : vector<1x16x34xf32> to vector<16x34xf32>
        %126 = vector.shape_cast %122 : vector<16x34xf32> to vector<1x16x34xf32>
        tpu.vector_store %arg6[%123, %c0_133, %c0_134], %126 {strides = array<i32>} : memref<2x16x34xf32, #tpu.memory_space<vmem>>, vector<1x16x34xf32>,
      }
      %c2_i32_93 = arith.constant 2 : i32
      %78 = vector.extract_strided_slice %61 {offsets = [0, 2], sizes = [16, 34], strides = [1, 1]} : vector<16x36xf32> to vector<16x34xf32>
      %c4_i32_94 = arith.constant 4 : i32
      %79 = arith.muli %0, %c4_i32_94 : i32
      %80 = arith.addi %79, %arg7 : i32
      %c3_i32_95 = arith.constant 3 : i32
      %81 = arith.muli %80, %c3_i32_95 : i32
      %c1_i32_96 = arith.constant 1 : i32
      %82 = arith.addi %81, %c1_i32_96 : i32
      %c3_i32_97 = arith.constant 3 : i32
      %83 = arith.muli %82, %c3_i32_97 : i32
      %c2_i32_98 = arith.constant 2 : i32
      %84 = arith.addi %83, %c2_i32_98 : i32
      %c0_i32_99 = arith.constant 0 : i32
      %c2_i32_100 = arith.constant 2 : i32
      %85 = arith.addi %c0_i32_99, %c2_i32_100 : i32
      %c1_i32_101 = arith.constant 1 : i32
      scf.for %arg8 = %c0_i32_99 to %85 step %c1_i32_101  : i32 {
        %c36_i32 = arith.constant 36 : i32
        %113 = arith.muli %arg8, %c36_i32 : i32
        %114 = arith.addi %84, %113 : i32
        %115 = arith.index_cast %114 : i32 to index
        %116 = memref.load %arg2[%115] : memref<144xf32, #tpu.memory_space<smem>>
        %117 = arith.index_cast %arg8 : i32 to index
        %c0_131 = arith.constant 0 : index
        %c0_132 = arith.constant 0 : index
        %118 = vector.load %arg6[%117, %c0_131, %c0_132] : memref<2x16x34xf32, #tpu.memory_space<vmem>>, vector<1x16x34xf32>
        %119 = vector.shape_cast %118 : vector<1x16x34xf32> to vector<16x34xf32>
        %120 = vector.broadcast %116 : f32 to vector<16x34xf32>
        %121 = arith.addf %78, %120 : vector<16x34xf32>
        %122 = arith.maximumf %119, %121 : vector<16x34xf32>
        %123 = arith.index_cast %arg8 : i32 to index
        %c0_133 = arith.constant 0 : index
        %c0_134 = arith.constant 0 : index
        %124 = vector.load %arg6[%123, %c0_133, %c0_134] : memref<2x16x34xf32, #tpu.memory_space<vmem>>, vector<1x16x34xf32>
        %125 = vector.shape_cast %124 : vector<1x16x34xf32> to vector<16x34xf32>
        %126 = vector.shape_cast %122 : vector<16x34xf32> to vector<1x16x34xf32>
        tpu.vector_store %arg6[%123, %c0_133, %c0_134], %126 {strides = array<i32>} : memref<2x16x34xf32, #tpu.memory_space<vmem>>, vector<1x16x34xf32>,
      }
      %c2_i32_102 = arith.constant 2 : i32
      %86 = arith.index_cast %arg7 : i32 to index
      %c2 = arith.constant 2 : index
      %c0_103 = arith.constant 0 : index
      %87 = vector.load %arg5[%86, %c2, %c0_103] : memref<4x18x36xf32, #tpu.memory_space<vmem>>, vector<1x16x36xf32>
      %88 = vector.shape_cast %87 : vector<1x16x36xf32> to vector<16x36xf32>
      %89 = vector.extract_strided_slice %88 {offsets = [0, 0], sizes = [16, 34], strides = [1, 1]} : vector<16x36xf32> to vector<16x34xf32>
      %c4_i32_104 = arith.constant 4 : i32
      %90 = arith.muli %0, %c4_i32_104 : i32
      %91 = arith.addi %90, %arg7 : i32
      %c3_i32_105 = arith.constant 3 : i32
      %92 = arith.muli %91, %c3_i32_105 : i32
      %c2_i32_106 = arith.constant 2 : i32
      %93 = arith.addi %92, %c2_i32_106 : i32
      %c3_i32_107 = arith.constant 3 : i32
      %94 = arith.muli %93, %c3_i32_107 : i32
      %c0_i32_108 = arith.constant 0 : i32
      %95 = arith.addi %94, %c0_i32_108 : i32
      %c0_i32_109 = arith.constant 0 : i32
      %c2_i32_110 = arith.constant 2 : i32
      %96 = arith.addi %c0_i32_109, %c2_i32_110 : i32
      %c1_i32_111 = arith.constant 1 : i32
      scf.for %arg8 = %c0_i32_109 to %96 step %c1_i32_111  : i32 {
        %c36_i32 = arith.constant 36 : i32
        %113 = arith.muli %arg8, %c36_i32 : i32
        %114 = arith.addi %95, %113 : i32
        %115 = arith.index_cast %114 : i32 to index
        %116 = memref.load %arg2[%115] : memref<144xf32, #tpu.memory_space<smem>>
        %117 = arith.index_cast %arg8 : i32 to index
        %c0_131 = arith.constant 0 : index
        %c0_132 = arith.constant 0 : index
        %118 = vector.load %arg6[%117, %c0_131, %c0_132] : memref<2x16x34xf32, #tpu.memory_space<vmem>>, vector<1x16x34xf32>
        %119 = vector.shape_cast %118 : vector<1x16x34xf32> to vector<16x34xf32>
        %120 = vector.broadcast %116 : f32 to vector<16x34xf32>
        %121 = arith.addf %89, %120 : vector<16x34xf32>
        %122 = arith.maximumf %119, %121 : vector<16x34xf32>
        %123 = arith.index_cast %arg8 : i32 to index
        %c0_133 = arith.constant 0 : index
        %c0_134 = arith.constant 0 : index
        %124 = vector.load %arg6[%123, %c0_133, %c0_134] : memref<2x16x34xf32, #tpu.memory_space<vmem>>, vector<1x16x34xf32>
        %125 = vector.shape_cast %124 : vector<1x16x34xf32> to vector<16x34xf32>
        %126 = vector.shape_cast %122 : vector<16x34xf32> to vector<1x16x34xf32>
        tpu.vector_store %arg6[%123, %c0_133, %c0_134], %126 {strides = array<i32>} : memref<2x16x34xf32, #tpu.memory_space<vmem>>, vector<1x16x34xf32>,
      }
      %c2_i32_112 = arith.constant 2 : i32
      %97 = vector.extract_strided_slice %88 {offsets = [0, 1], sizes = [16, 34], strides = [1, 1]} : vector<16x36xf32> to vector<16x34xf32>
      %c4_i32_113 = arith.constant 4 : i32
      %98 = arith.muli %0, %c4_i32_113 : i32
      %99 = arith.addi %98, %arg7 : i32
      %c3_i32_114 = arith.constant 3 : i32
      %100 = arith.muli %99, %c3_i32_114 : i32
      %c2_i32_115 = arith.constant 2 : i32
      %101 = arith.addi %100, %c2_i32_115 : i32
      %c3_i32_116 = arith.constant 3 : i32
      %102 = arith.muli %101, %c3_i32_116 : i32
      %c1_i32_117 = arith.constant 1 : i32
      %103 = arith.addi %102, %c1_i32_117 : i32
      %c0_i32_118 = arith.constant 0 : i32
      %c2_i32_119 = arith.constant 2 : i32
      %104 = arith.addi %c0_i32_118, %c2_i32_119 : i32
      %c1_i32_120 = arith.constant 1 : i32
      scf.for %arg8 = %c0_i32_118 to %104 step %c1_i32_120  : i32 {
        %c36_i32 = arith.constant 36 : i32
        %113 = arith.muli %arg8, %c36_i32 : i32
        %114 = arith.addi %103, %113 : i32
        %115 = arith.index_cast %114 : i32 to index
        %116 = memref.load %arg2[%115] : memref<144xf32, #tpu.memory_space<smem>>
        %117 = arith.index_cast %arg8 : i32 to index
        %c0_131 = arith.constant 0 : index
        %c0_132 = arith.constant 0 : index
        %118 = vector.load %arg6[%117, %c0_131, %c0_132] : memref<2x16x34xf32, #tpu.memory_space<vmem>>, vector<1x16x34xf32>
        %119 = vector.shape_cast %118 : vector<1x16x34xf32> to vector<16x34xf32>
        %120 = vector.broadcast %116 : f32 to vector<16x34xf32>
        %121 = arith.addf %97, %120 : vector<16x34xf32>
        %122 = arith.maximumf %119, %121 : vector<16x34xf32>
        %123 = arith.index_cast %arg8 : i32 to index
        %c0_133 = arith.constant 0 : index
        %c0_134 = arith.constant 0 : index
        %124 = vector.load %arg6[%123, %c0_133, %c0_134] : memref<2x16x34xf32, #tpu.memory_space<vmem>>, vector<1x16x34xf32>
        %125 = vector.shape_cast %124 : vector<1x16x34xf32> to vector<16x34xf32>
        %126 = vector.shape_cast %122 : vector<16x34xf32> to vector<1x16x34xf32>
        tpu.vector_store %arg6[%123, %c0_133, %c0_134], %126 {strides = array<i32>} : memref<2x16x34xf32, #tpu.memory_space<vmem>>, vector<1x16x34xf32>,
      }
      %c2_i32_121 = arith.constant 2 : i32
      %105 = vector.extract_strided_slice %88 {offsets = [0, 2], sizes = [16, 34], strides = [1, 1]} : vector<16x36xf32> to vector<16x34xf32>
      %c4_i32_122 = arith.constant 4 : i32
      %106 = arith.muli %0, %c4_i32_122 : i32
      %107 = arith.addi %106, %arg7 : i32
      %c3_i32_123 = arith.constant 3 : i32
      %108 = arith.muli %107, %c3_i32_123 : i32
      %c2_i32_124 = arith.constant 2 : i32
      %109 = arith.addi %108, %c2_i32_124 : i32
      %c3_i32_125 = arith.constant 3 : i32
      %110 = arith.muli %109, %c3_i32_125 : i32
      %c2_i32_126 = arith.constant 2 : i32
      %111 = arith.addi %110, %c2_i32_126 : i32
      %c0_i32_127 = arith.constant 0 : i32
      %c2_i32_128 = arith.constant 2 : i32
      %112 = arith.addi %c0_i32_127, %c2_i32_128 : i32
      %c1_i32_129 = arith.constant 1 : i32
      scf.for %arg8 = %c0_i32_127 to %112 step %c1_i32_129  : i32 {
        %c36_i32 = arith.constant 36 : i32
        %113 = arith.muli %arg8, %c36_i32 : i32
        %114 = arith.addi %111, %113 : i32
        %115 = arith.index_cast %114 : i32 to index
        %116 = memref.load %arg2[%115] : memref<144xf32, #tpu.memory_space<smem>>
        %117 = arith.index_cast %arg8 : i32 to index
        %c0_131 = arith.constant 0 : index
        %c0_132 = arith.constant 0 : index
        %118 = vector.load %arg6[%117, %c0_131, %c0_132] : memref<2x16x34xf32, #tpu.memory_space<vmem>>, vector<1x16x34xf32>
        %119 = vector.shape_cast %118 : vector<1x16x34xf32> to vector<16x34xf32>
        %120 = vector.broadcast %116 : f32 to vector<16x34xf32>
        %121 = arith.addf %105, %120 : vector<16x34xf32>
        %122 = arith.maximumf %119, %121 : vector<16x34xf32>
        %123 = arith.index_cast %arg8 : i32 to index
        %c0_133 = arith.constant 0 : index
        %c0_134 = arith.constant 0 : index
        %124 = vector.load %arg6[%123, %c0_133, %c0_134] : memref<2x16x34xf32, #tpu.memory_space<vmem>>, vector<1x16x34xf32>
        %125 = vector.shape_cast %124 : vector<1x16x34xf32> to vector<16x34xf32>
        %126 = vector.shape_cast %122 : vector<16x34xf32> to vector<1x16x34xf32>
        tpu.vector_store %arg6[%123, %c0_133, %c0_134], %126 {strides = array<i32>} : memref<2x16x34xf32, #tpu.memory_space<vmem>>, vector<1x16x34xf32>,
      }
      %c2_i32_130 = arith.constant 2 : i32
    }
    %c4_i32_18 = arith.constant 4 : i32
    %c0_19 = arith.constant 0 : index
    %c0_20 = arith.constant 0 : index
    %c0_21 = arith.constant 0 : index
    %12 = vector.load %arg6[%c0_19, %c0_20, %c0_21] : memref<2x16x34xf32, #tpu.memory_space<vmem>>, vector<1x16x16xf32>
    %13 = vector.shape_cast %12 : vector<1x16x16xf32> to vector<16x16xf32>
    %c0_22 = arith.constant 0 : index
    %c0_23 = arith.constant 0 : index
    %c0_24 = arith.constant 0 : index
    %c0_25 = arith.constant 0 : index
    %14 = vector.load %arg4[%c0_22, %c0_23, %c0_24, %c0_25] : memref<2x2x16x16xf32, #tpu.memory_space<vmem>>, vector<1x1x16x16xf32>
    %15 = vector.shape_cast %14 : vector<1x1x16x16xf32> to vector<16x16xf32>
    %16 = vector.shape_cast %13 : vector<16x16xf32> to vector<1x1x16x16xf32>
    tpu.vector_store %arg4[%c0_22, %c0_23, %c0_24, %c0_25], %16 {strides = array<i32>} : memref<2x2x16x16xf32, #tpu.memory_space<vmem>>, vector<1x1x16x16xf32>,
    %c1_26 = arith.constant 1 : index
    %c0_27 = arith.constant 0 : index
    %c0_28 = arith.constant 0 : index
    %17 = vector.load %arg6[%c1_26, %c0_27, %c0_28] : memref<2x16x34xf32, #tpu.memory_space<vmem>>, vector<1x16x16xf32>
    %18 = vector.shape_cast %17 : vector<1x16x16xf32> to vector<16x16xf32>
    %c0_29 = arith.constant 0 : index
    %c1_30 = arith.constant 1 : index
    %c0_31 = arith.constant 0 : index
    %c0_32 = arith.constant 0 : index
    %19 = vector.load %arg4[%c0_29, %c1_30, %c0_31, %c0_32] : memref<2x2x16x16xf32, #tpu.memory_space<vmem>>, vector<1x1x16x16xf32>
    %20 = vector.shape_cast %19 : vector<1x1x16x16xf32> to vector<16x16xf32>
    %21 = vector.shape_cast %18 : vector<16x16xf32> to vector<1x1x16x16xf32>
    tpu.vector_store %arg4[%c0_29, %c1_30, %c0_31, %c0_32], %21 {strides = array<i32>} : memref<2x2x16x16xf32, #tpu.memory_space<vmem>>, vector<1x1x16x16xf32>,
    %c0_33 = arith.constant 0 : index
    %c0_34 = arith.constant 0 : index
    %c18 = arith.constant 18 : index
    %22 = vector.load %arg6[%c0_33, %c0_34, %c18] : memref<2x16x34xf32, #tpu.memory_space<vmem>>, vector<1x16x16xf32>
    %23 = vector.shape_cast %22 : vector<1x16x16xf32> to vector<16x16xf32>
    %c1_35 = arith.constant 1 : index
    %c0_36 = arith.constant 0 : index
    %c0_37 = arith.constant 0 : index
    %c0_38 = arith.constant 0 : index
    %24 = vector.load %arg4[%c1_35, %c0_36, %c0_37, %c0_38] : memref<2x2x16x16xf32, #tpu.memory_space<vmem>>, vector<1x1x16x16xf32>
    %25 = vector.shape_cast %24 : vector<1x1x16x16xf32> to vector<16x16xf32>
    %26 = vector.shape_cast %23 : vector<16x16xf32> to vector<1x1x16x16xf32>
    tpu.vector_store %arg4[%c1_35, %c0_36, %c0_37, %c0_38], %26 {strides = array<i32>} : memref<2x2x16x16xf32, #tpu.memory_space<vmem>>, vector<1x1x16x16xf32>,
    %c1_39 = arith.constant 1 : index
    %c0_40 = arith.constant 0 : index
    %c18_41 = arith.constant 18 : index
    %27 = vector.load %arg6[%c1_39, %c0_40, %c18_41] : memref<2x16x34xf32, #tpu.memory_space<vmem>>, vector<1x16x16xf32>
    %28 = vector.shape_cast %27 : vector<1x16x16xf32> to vector<16x16xf32>
    %c1_42 = arith.constant 1 : index
    %c1_43 = arith.constant 1 : index
    %c0_44 = arith.constant 0 : index
    %c0_45 = arith.constant 0 : index
    %29 = vector.load %arg4[%c1_42, %c1_43, %c0_44, %c0_45] : memref<2x2x16x16xf32, #tpu.memory_space<vmem>>, vector<1x1x16x16xf32>
    %30 = vector.shape_cast %29 : vector<1x1x16x16xf32> to vector<16x16xf32>
    %31 = vector.shape_cast %28 : vector<16x16xf32> to vector<1x1x16x16xf32>
    tpu.vector_store %arg4[%c1_42, %c1_43, %c0_44, %c0_45], %31 {strides = array<i32>} : memref<2x2x16x16xf32, #tpu.memory_space<vmem>>, vector<1x1x16x16xf32>,
    return
  }
  func.func @transform_0(%arg0: i32, %arg1: i32) -> i32 {
    %c0_i32 = arith.constant 0 : i32
    %c0_i32_0 = arith.constant 0 : i32
    return %c0_i32 : i32
  }
  func.func @transform_1(%arg0: i32, %arg1: i32) -> (i32, i32, i32, i32) {
    %c0_i32 = arith.constant 0 : i32
    %c0_i32_0 = arith.constant 0 : i32
    %c0_i32_1 = arith.constant 0 : i32
    %c0_i32_2 = arith.constant 0 : i32
    return %arg0, %c0_i32, %c0_i32_0, %c0_i32_1 : i32, i32, i32, i32
  }
  func.func @transform_2(%arg0: i32, %arg1: i32) -> (i32, i32, i32, i32) {
    %c0_i32 = arith.constant 0 : i32
    %c0_i32_0 = arith.constant 0 : i32
    %c0_i32_1 = arith.constant 0 : i32
    return %arg0, %arg1, %c0_i32, %c0_i32_0 : i32, i32, i32, i32
  }
}

</mosaic_0001>

<llo_original>
// kernel: morphology.1
$region0: #{morphology.1}
  #allocation0 [shape = 'u32[]', space=smem, size = 0x4, offset = 0x4, fixed_abs, tag = 'smem constant byte address 0x4 - core index']
  #allocation1 [shape = 'u32[144,128]{1,0:T(1,128)}', space=vmem, size = 0x12000, scoped, tag = 'internal scratch']
  #allocation2 [shape = 'f32[4,18,36]{2,1,0:T(8,128)}', space=vmem, size = 0xc000, scoped, tag = 'scratch operand']
  #allocation3 [shape = 'f32[2,16,34]{2,1,0:T(8,128)}', space=vmem, size = 0x4000, scoped, tag = 'scratch operand']
  #allocation8 [shape = 's32[]', space=sflag, size = 0x4, offset = 0, fixed_abs, tag = 'sflag constant byte address 0x0 - dummy sync flag']
  %s0 = inlined_call_operand.vmem [shape: f32[144], index: 0, kind: input, shape index: {}]
  %s1 = inlined_call_operand.vmem [shape: f32[2,4,16,16], index: 1, kind: input, shape index: {}]
  %s2 = inlined_call_operand.hbm [shape: f32[2,4,16,16], index: 2, kind: output, shape index: {}]
  %s3 = sld [smem:[#allocation0]]
  $region115: #{morphology.1} parent=0
    _
  %s5 = ssub.s32 1, %s3
  %s6 = scalar_select 0, %s5, %s3
  $region1: #{morphology.1} parent=0
    #allocation4 [shape = 'u8[1024]{0}', space=smem, size = 0x400, scoped, tag = 'input window, operand 0, single buffered']
    #allocation5 [shape = 's32[2]{0}', space=sflag, size = 0x8, scoped, tag = 'scoped memory for morphology.1']
    #allocation6 [shape = 's32[2]{0}', space=sflag, size = 0x8, scoped, tag = 'scoped memory for morphology.1']
    #allocation7 [shape = 'u8[65536]{0}', space=vmem, size = 0x10000, scoped, tag = 'output window, operand 0']
    %7 = vsyncpa [#allocation6], 0
    %8 = vsyncpa [#allocation5], 0
    %s9 = scalar_lea.sflag [#allocation5], 1
    %10 = vsyncpa %s9, 0
    loop: start=0, step=1, limit=4
    $region2: #{morphology.1} parent=1 // loop_pre_header
      _
    $region3: #{morphology.1} parent=1 // loop_header
      %s12 = sphi 0, %s16
      %p13 = scmp.ge.s32.totalorder %s12, 4
      %s19 = sphi 0, %s31
      %s20 = sphi 0, %s27
      %s21 = sphi 0, %s19
      %s22 = sphi 0, %s20
      %s23 = sphi 0, %s21
      %s24 = sphi 0, %s22
      %s32 = sphi 0, %s32
      %s34 = sphi 0, %s32
      %s35 = sphi 0, %s34
      %s49 = sphi 0, %s35
      %s55 = sphi 0, %s57
      %s58 = sphi 0, %s55
      %s59 = sphi 0, %s58
      %s75 = sphi 0, %s59
      %s83 = sphi 0, %s85
      %s86 = sphi 0, %s83
      %s87 = sphi 0, %s86
      %s103 = sphi 0, %s87
    $region4: #{morphology.1} parent=1 // loop_header_branch
      %15 = sbr.rel (%p13) target = $region8
    $region5: #{morphology.1} parent=1 // loop_body
      %s17 = ssub.s32 %s12, 1
      %s18 = ssub.s32 %s12, 2
      %s25 = sadd.s32 1, %s20
      %p26 = scmp.ge.s32.totalorder %s25, 2
      %s27 = scalar_select %p26, 0, %s25
      %s28 = sadd.s32 1, %s19
      %s29 = scalar_select %p26, %s28, %s19
      %p30 = scmp.ge.s32.totalorder %s29, 1
      %s31 = scalar_select %p30, 0, %s29
      %s33 = sadd.s32 %s32, 1
      %p36 = scmp.eq.s32.totalorder %s12, 1
      %p37 = scmp.ne.s32.totalorder %s32, %s34
      %p38 = scmp.eq.s32.totalorder %s12, 0
      %p39 = por %p37, %p38
      %p40 = scmp.ne.s32.totalorder %s32, %s34
      %p41 = scmp.eq.s32.totalorder %s17, 1
      %p42 = por %p40, %p41
      %p43 = scmp.ne.s32.totalorder %s34, %s35
      %p44 = scmp.eq.s32.totalorder %s17, 0
      %p45 = por %p43, %p44
      %p46 = scmp.ne.s32.totalorder %s34, %s35
      %p47 = scmp.eq.s32.totalorder %s18, 1
      %p48 = por %p46, %p47
      %p50 = scmp.ne.s32.totalorder %s35, %s49
      %p51 = scmp.eq.s32.totalorder %s18, 0
      %p52 = por %p50, %p51
      %s53 = ssub.s32 %s19, %s31
      %p54 = scmp.eq.s32.totalorder %s53, 0
      %s56 = sadd.s32 %s55, 1
      %s57 = scalar_select %p54, %s55, %s56
      %p60 = pneg %p54
      %p61 = scmp.eq.s32.totalorder %s12, 1
      %p62 = por %p60, %p61
      %p63 = scmp.ne.s32.totalorder %s55, %s58
      %p64 = scmp.eq.s32.totalorder %s12, 0
      %p65 = por %p63, %p64
      %p66 = scmp.ne.s32.totalorder %s55, %s58
      %p67 = scmp.eq.s32.totalorder %s17, 1
      %p68 = por %p66, %p67
      %p69 = scmp.ne.s32.totalorder %s58, %s59
      %p70 = scmp.eq.s32.totalorder %s17, 0
      %p71 = por %p69, %p70
      %p72 = scmp.ne.s32.totalorder %s58, %s59
      %p73 = scmp.eq.s32.totalorder %s18, 1
      %p74 = por %p72, %p73
      %p76 = scmp.ne.s32.totalorder %s59, %s75
      %p77 = scmp.eq.s32.totalorder %s18, 0
      %p78 = por %p76, %p77
      %s79 = ssub.s32 %s19, %s31
      %s80 = ssub.s32 %s20, %s27
      %s81 = sor.u32 %s79, %s80
      %p82 = scmp.eq.s32.totalorder %s81, 0
      %s84 = sadd.s32 %s83, 1
      %s85 = scalar_select %p82, %s83, %s84
      %p88 = pneg %p82
      %p89 = scmp.eq.s32.totalorder %s12, 1
      %p90 = por %p88, %p89
      %p91 = scmp.ne.s32.totalorder %s83, %s86
      %p92 = scmp.eq.s32.totalorder %s12, 0
      %p93 = por %p91, %p92
      %p94 = scmp.ne.s32.totalorder %s83, %s86
      %p95 = scmp.eq.s32.totalorder %s17, 1
      %p96 = por %p94, %p95
      %p97 = scmp.ne.s32.totalorder %s86, %s87
      %p98 = scmp.eq.s32.totalorder %s17, 0
      %p99 = por %p97, %p98
      %p100 = scmp.ne.s32.totalorder %s86, %s87
      %p101 = scmp.eq.s32.totalorder %s18, 1
      %p102 = por %p100, %p101
      %p104 = scmp.ne.s32.totalorder %s87, %s103
      %p105 = scmp.eq.s32.totalorder %s18, 0
      %p106 = por %p104, %p105
      %p107 = scmp.le.s32.totalorder 1, %s12
      %p108 = scmp.lt.s32.totalorder %s12, 3
      %p109 = pnand %p107, %p108
      %p110 = pneg %p109
      // Predicated region
      $region9: #{morphology.1} parent=5 // pred_check
        _
      $region10: #{morphology.1} parent=5 // pred_check_branch
        %112 = sbr.rel (%p109) target = $region12
      $region11: #{morphology.1} parent=5 // pred_region
        %s113 = ssub.s32 %s12, 1
        // Predicated region
        $region13: #{morphology.1} parent=11 // pred_check
          %p114 = pneg %p45
        $region14: #{morphology.1} parent=11 // pred_check_branch
          %116 = sbr.rel (%p114) target = $region16
        $region15: #{morphology.1} parent=11 // pred_region
          %s118 = ssub.s32 32, 32
          %119 = vsyncadd [#allocation6], %s118
          %s121 = sshll.u32 %s0, 4
          %s122 = int_to_ptr.vmem [resolvable:$true] %s121
          %124 = dma.vmem_to_smem %s122, 32, [#allocation4], [#allocation6]
        $region16: #{morphology.1} parent=11 // pred_fallthru
          _
        // Predicated region
        $region17: #{morphology.1} parent=11 // pred_check
          %p125 = pneg %p71
        $region18: #{morphology.1} parent=11 // pred_check_branch
          %127 = sbr.rel (%p125) target = $region20
        $region19: #{morphology.1} parent=11 // pred_region
          %s128 = smul.u32 2, %s21
          %p129 = scmp.lt.s32.totalorder %s128, 1
          %s130 = scalar_select %p129, %s128, 1
          %s131 = smul.addr %s130, 8
          %s132 = smul.addr %s131, 8
          %s133 = scalar_lea.vmem %s1, %s132
          %s134 = smul.u32 2, %s21
        $region20: #{morphology.1} parent=11 // pred_fallthru
          _
      $region12: #{morphology.1} parent=5 // pred_fallthru
        _
      %p135 = scmp.lt.s32.totalorder %s12, 2
      // Predicated region
      $region21: #{morphology.1} parent=5 // pred_check
        %p136 = pneg %p135
      $region22: #{morphology.1} parent=5 // pred_check_branch
        %138 = sbr.rel (%p136) target = $region24
      $region23: #{morphology.1} parent=5 // pred_region
        _
      $region24: #{morphology.1} parent=5 // pred_fallthru
        _
      %p139 = scmp.le.s32.totalorder 1, %s12
      %p140 = scmp.lt.s32.totalorder %s12, 3
      %p141 = pnand %p139, %p140
      %p142 = pneg %p141
      // Predicated region
      $region25: #{morphology.1} parent=5 // pred_check
        _
      $region26: #{morphology.1} parent=5 // pred_check_branch
        %144 = sbr.rel (%p141) target = $region28
      $region27: #{morphology.1} parent=5 // pred_region
        %s145 = ssub.s32 %s12, 1
        // Predicated region
        $region29: #{morphology.1} parent=27 // pred_check
          %p146 = pneg %p45
        $region30: #{morphology.1} parent=27 // pred_check_branch
          %148 = sbr.rel (%p146) target = $region32
        $region31: #{morphology.1} parent=27 // pred_region
          %149 = dma.done [#allocation6], 32
        $region32: #{morphology.1} parent=27 // pred_fallthru
          _
        %150 = sfence
        %p151 = pneg %p45
        %p152 = pneg %p42
        %s153 = smul.u32 2, %s21
        %p154 = scmp.lt.s32.totalorder %s153, 1
        %s155 = scalar_select %p154, %s153, 1
        %s156 = smul.addr %s155, 8
        %s157 = smul.addr %s156, 8
        %s158 = scalar_lea.vmem %s1, %s157
        %p159 = pneg %p71
        %p160 = pneg %p68
        %p161 = pneg %p99
        %p162 = pneg %p96
        %s163 = sand.u32 %s86, 1
        %s164 = scalar_lea.sflag [#allocation5], %s163
        %s165 = sand.u32 %s86, 1
        %s166 = smul.addr %s165, 64
        %s167 = scalar_lea.vmem [#allocation7], %s166
        %s168 = smul.u32 2, %s21
        %p169 = scmp.lt.s32.totalorder %s168, 1
        %s170 = scalar_select %p169, %s168, 1
        %s171 = smul.addr %s170, 8
        %s172 = smul.addr %s171, 8
        %s173 = scalar_lea.vmem %s1, %s172
        %s174 = smul.u32 2, %s21
        %s175 = smul.u32 2, %s21
        %s176 = smul.u32 2, %s22
        %vm177 = vcmask 293888
        %178 = vst.msk [vmem:[#allocation2] sm:$0xff] %vm177, 0.0
        %179 = vst.msk [vmem:[#allocation2 + $0x8] sm:$0xff] %vm177, 0.0
        %vm180 = vcmask 287744
        %181 = vst.msk [vmem:[#allocation2 + $0x10] sm:$0x3] %vm180, 0.0
        %182 = vst.msk [vmem:[#allocation2 + $0x18] sm:$0xff] %vm177, 0.0
        %183 = vst.msk [vmem:[#allocation2 + $0x20] sm:$0xff] %vm177, 0.0
        %184 = vst.msk [vmem:[#allocation2 + $0x28] sm:$0x3] %vm180, 0.0
        %185 = vst.msk [vmem:[#allocation2 + $0x30] sm:$0xff] %vm177, 0.0
        %186 = vst.msk [vmem:[#allocation2 + $0x38] sm:$0xff] %vm177, 0.0
        %187 = vst.msk [vmem:[#allocation2 + $0x40] sm:$0x3] %vm180, 0.0
        %188 = vst.msk [vmem:[#allocation2 + $0x48] sm:$0xff] %vm177, 0.0
        %189 = vst.msk [vmem:[#allocation2 + $0x50] sm:$0xff] %vm177, 0.0
        %190 = vst.msk [vmem:[#allocation2 + $0x58] sm:$0x3] %vm180, 0.0
        %v191 = vld [vmem:[%s173] sm:$0xff]
        %v192 = vld [vmem:[%s173 + $0x8] sm:$0xff]
        %v193 = vld [vmem:[%s173 + $0x10] sm:$0xff]
        %v194 = vld [vmem:[%s173 + $0x18] sm:$0xff]
        %v195 = vld [vmem:[%s173 + $0x20] sm:$0xff]
        %v196 = vld [vmem:[%s173 + $0x28] sm:$0xff]
        %v197 = vld [vmem:[%s173 + $0x30] sm:$0xff]
        %v198 = vld [vmem:[%s173 + $0x38] sm:$0xff]
        %207 = vrot.lane.b32.xlu0 %v191, 1
        %v208 = vpop.permute.xlu0 %207
        %209 = vrot.lane.b32.xlu0 %v192, 1
        %v210 = vpop.permute.xlu0 %209
        %211 = vrot.lane.b32.xlu0 %v193, 1
        %v212 = vpop.permute.xlu0 %211
        %213 = vrot.lane.b32.xlu0 %v194, 1
        %v214 = vpop.permute.xlu0 %213
        %215 = vrot.lane.b32.xlu0 %v195, 1
        %v216 = vpop.permute.xlu0 %215
        %217 = vrot.lane.b32.xlu0 %v196, 1
        %v218 = vpop.permute.xlu0 %217
        %219 = vrot.lane.b32.xlu0 %v197, 1
        %v220 = vpop.permute.xlu0 %219
        %221 = vrot.lane.b32.xlu0 %v198, 1
        %v222 = vpop.permute.xlu0 %221
        %vm231 = vcmask 138248
        %232 = vst.msk [vmem:[#allocation2 + $0x1] sm:$0xff] %vm231, %v208
        %233 = vst.msk [vmem:[#allocation2 + $0x9] sm:$0xff] %vm231, %v210
        %234 = vst.msk [vmem:[#allocation2 + $0x19] sm:$0xff] %vm231, %v212
        %235 = vst.msk [vmem:[#allocation2 + $0x21] sm:$0xff] %vm231, %v214
        %236 = vst.msk [vmem:[#allocation2 + $0x31] sm:$0xff] %vm231, %v216
        %237 = vst.msk [vmem:[#allocation2 + $0x39] sm:$0xff] %vm231, %v218
        %238 = vst.msk [vmem:[#allocation2 + $0x49] sm:$0xff] %vm231, %v220
        %239 = vst.msk [vmem:[#allocation2 + $0x51] sm:$0xff] %vm231, %v222
        %s240 = scalar_lea.vmem %s173, 64
        %v241 = vld [vmem:[%s240] sm:$0xff]
        %v242 = vld [vmem:[%s240 + $0x8] sm:$0xff]
        %v243 = vld [vmem:[%s240 + $0x10] sm:$0xff]
        %v244 = vld [vmem:[%s240 + $0x18] sm:$0xff]
        %v245 = vld [vmem:[%s240 + $0x20] sm:$0xff]
        %v246 = vld [vmem:[%s240 + $0x28] sm:$0xff]
        %v247 = vld [vmem:[%s240 + $0x30] sm:$0xff]
        %v248 = vld [vmem:[%s240 + $0x38] sm:$0xff]
        %257 = vrot.lane.b32.xlu0 %v241, 19
        %v258 = vpop.permute.xlu0 %257
        %259 = vrot.lane.b32.xlu0 %v242, 19
        %v260 = vpop.permute.xlu0 %259
        %261 = vrot.lane.b32.xlu0 %v243, 19
        %v262 = vpop.permute.xlu0 %261
        %263 = vrot.lane.b32.xlu0 %v244, 19
        %v264 = vpop.permute.xlu0 %263
        %265 = vrot.lane.b32.xlu0 %v245, 19
        %v266 = vpop.permute.xlu0 %265
        %267 = vrot.lane.b32.xlu0 %v246, 19
        %v268 = vpop.permute.xlu0 %267
        %269 = vrot.lane.b32.xlu0 %v247, 19
        %v270 = vpop.permute.xlu0 %269
        %271 = vrot.lane.b32.xlu0 %v248, 19
        %v272 = vpop.permute.xlu0 %271
        %vm281 = vcmask 285848
        %282 = vst.msk [vmem:[#allocation2 + $0x1] sm:$0xff] %vm281, %v258
        %283 = vst.msk [vmem:[#allocation2 + $0x9] sm:$0xff] %vm281, %v260
        %284 = vst.msk [vmem:[#allocation2 + $0x19] sm:$0xff] %vm281, %v262
        %285 = vst.msk [vmem:[#allocation2 + $0x21] sm:$0xff] %vm281, %v264
        %286 = vst.msk [vmem:[#allocation2 + $0x31] sm:$0xff] %vm281, %v266
        %287 = vst.msk [vmem:[#allocation2 + $0x39] sm:$0xff] %vm281, %v268
        %288 = vst.msk [vmem:[#allocation2 + $0x49] sm:$0xff] %vm281, %v270
        %289 = vst.msk [vmem:[#allocation2 + $0x51] sm:$0xff] %vm281, %v272
        %vm290 = vcmask 277504
        %291 = vst.msk [vmem:[#allocation3] sm:$0xff] %vm290, -inf
        %292 = vst.msk [vmem:[#allocation3 + $0x8] sm:$0xff] %vm290, -inf
        %293 = vst.msk [vmem:[#allocation3 + $0x10] sm:$0xff] %vm290, -inf
        %294 = vst.msk [vmem:[#allocation3 + $0x18] sm:$0xff] %vm290, -inf
        loop: start=0, step=1, limit=4
        $region33: #{morphology.1} parent=27 // loop_pre_header
          _
        $region34: #{morphology.1} parent=27 // loop_header
          %s296 = sphi 0, %s300
          %p297 = scmp.ge.s32.totalorder %s296, 4
        $region35: #{morphology.1} parent=27 // loop_header_branch
          %299 = sbr.rel (%p297) target = $region39
        $region36: #{morphology.1} parent=27 // loop_body
          %s301 = smul.u32 %s296, 24
          %s302 = scalar_lea.vmem [#allocation2], %s301
          %v303 = vld [vmem:[%s302] sm:$0xff]
          %v304 = vld [vmem:[%s302 + $0x8] sm:$0xff]
          %s305 = smul.u32 %s22, 8
          %s306 = sadd.s32 %s305, %s296
          %s307 = smul.u32 %s306, 9
          loop: start=0, step=1, limit=2
          $region40: #{morphology.1} parent=36 // loop_pre_header
            _
          $region41: #{morphology.1} parent=36 // loop_header
            %s309 = sphi 0, %s313
            %p310 = scmp.ge.s32.totalorder %s309, 2
          $region42: #{morphology.1} parent=36 // loop_header_branch
            %312 = sbr.rel (%p310) target = $region46
          $region43: #{morphology.1} parent=36 // loop_body
            %s314 = smul.u32 %s309, 36
            %s315 = sadd.s32 %s307, %s314
            %s316 = sld [smem:[#allocation4 + %s315]]
            %s317 = smul.u32 %s309, 16
            %s318 = scalar_lea.vmem [#allocation3], %s317
            %v319 = vld [vmem:[%s318] sm:$0xff]
            %v320 = vld [vmem:[%s318 + $0x8] sm:$0xff]
            %v321 = vstv %s316
            %v322 = vadd.f32 %v303, %v321
            %v323 = vadd.f32 %v304, %v321
            %v324 = vmax.f32 %v319, %v322
            %v325 = vmax.f32 %v320, %v323
            %326 = vst.msk [vmem:[%s318] sm:$0xff] %vm290, %v324
            %327 = vst.msk [vmem:[%s318 + $0x8] sm:$0xff] %vm290, %v325
          $region44: #{morphology.1} parent=36 // loop_footer
            %s313 = sadd.s32 1, %s309
          $region45: #{morphology.1} parent=36 // loop_footer_branch
            %308 = sbr.rel target = $region41
          $region46: #{morphology.1} parent=36 // loop_exit
            _
          %s328 = sadd.s32 %s307, 1
          loop: start=0, step=1, limit=2
          $region47: #{morphology.1} parent=36 // loop_pre_header
            _
          $region48: #{morphology.1} parent=36 // loop_header
            %s330 = sphi 0, %s334
            %p331 = scmp.ge.s32.totalorder %s330, 2
          $region49: #{morphology.1} parent=36 // loop_header_branch
            %333 = sbr.rel (%p331) target = $region53
          $region50: #{morphology.1} parent=36 // loop_body
            %s335 = smul.u32 %s330, 36
            %s336 = sadd.s32 %s328, %s335
            %s337 = sld [smem:[#allocation4 + %s336]]
            %s338 = smul.u32 %s330, 16
            %s339 = scalar_lea.vmem [#allocation3], %s338
            %v340 = vld [vmem:[%s339] sm:$0xff]
            %v341 = vld [vmem:[%s339 + $0x8] sm:$0xff]
            %v342 = vstv %s337
            %v343 = vadd.f32 %v303, %v342
            %v344 = vadd.f32 %v304, %v342
            %347 = vrot.lane.b32.xlu0 %v343, 127
            %v348 = vpop.permute.xlu0 %347
            %349 = vrot.lane.b32.xlu0 %v344, 127
            %v350 = vpop.permute.xlu0 %349
            %v353 = vmax.f32 %v340, %v348
            %v354 = vmax.f32 %v341, %v350
            %355 = vst.msk [vmem:[%s339] sm:$0xff] %vm290, %v353
            %356 = vst.msk [vmem:[%s339 + $0x8] sm:$0xff] %vm290, %v354
          $region51: #{morphology.1} parent=36 // loop_footer
            %s334 = sadd.s32 1, %s330
          $region52: #{morphology.1} parent=36 // loop_footer_branch
            %329 = sbr.rel target = $region48
          $region53: #{morphology.1} parent=36 // loop_exit
            _
          %s357 = sadd.s32 %s307, 2
          loop: start=0, step=1, limit=2
          $region54: #{morphology.1} parent=36 // loop_pre_header
            _
          $region55: #{morphology.1} parent=36 // loop_header
            %s359 = sphi 0, %s363
            %p360 = scmp.ge.s32.totalorder %s359, 2
          $region56: #{morphology.1} parent=36 // loop_header_branch
            %362 = sbr.rel (%p360) target = $region60
          $region57: #{morphology.1} parent=36 // loop_body
            %s364 = smul.u32 %s359, 36
            %s365 = sadd.s32 %s357, %s364
            %s366 = sld [smem:[#allocation4 + %s365]]
            %s367 = smul.u32 %s359, 16
            %s368 = scalar_lea.vmem [#allocation3], %s367
            %v369 = vld [vmem:[%s368] sm:$0xff]
            %v370 = vld [vmem:[%s368 + $0x8] sm:$0xff]
            %v371 = vstv %s366
            %v372 = vadd.f32 %v303, %v371
            %v373 = vadd.f32 %v304, %v371
            %376 = vrot.lane.b32.xlu0 %v372, 126
            %v377 = vpop.permute.xlu0 %376
            %378 = vrot.lane.b32.xlu0 %v373, 126
            %v379 = vpop.permute.xlu0 %378
            %v382 = vmax.f32 %v369, %v377
            %v383 = vmax.f32 %v370, %v379
            %384 = vst.msk [vmem:[%s368] sm:$0xff] %vm290, %v382
            %385 = vst.msk [vmem:[%s368 + $0x8] sm:$0xff] %vm290, %v383
          $region58: #{morphology.1} parent=36 // loop_footer
            %s363 = sadd.s32 1, %s359
          $region59: #{morphology.1} parent=36 // loop_footer_branch
            %358 = sbr.rel target = $region55
          $region60: #{morphology.1} parent=36 // loop_exit
            _
          %v386 = vld [vmem:[%s302 + $0x1] sm:$0xff]
          %v387 = vld [vmem:[%s302 + $0x9] sm:$0xff]
          %s388 = smul.u32 %s306, 3
          %s389 = sadd.s32 %s388, 1
          %s390 = smul.u32 %s389, 3
          loop: start=0, step=1, limit=2
          $region61: #{morphology.1} parent=36 // loop_pre_header
            _
          $region62: #{morphology.1} parent=36 // loop_header
            %s392 = sphi 0, %s396
            %p393 = scmp.ge.s32.totalorder %s392, 2
          $region63: #{morphology.1} parent=36 // loop_header_branch
            %395 = sbr.rel (%p393) target = $region67
          $region64: #{morphology.1} parent=36 // loop_body
            %s397 = smul.u32 %s392, 36
            %s398 = sadd.s32 %s390, %s397
            %s399 = sld [smem:[#allocation4 + %s398]]
            %s400 = smul.u32 %s392, 16
            %s401 = scalar_lea.vmem [#allocation3], %s400
            %v402 = vld [vmem:[%s401] sm:$0xff]
            %v403 = vld [vmem:[%s401 + $0x8] sm:$0xff]
            %v404 = vstv %s399
            %v405 = vadd.f32 %v386, %v404
            %v406 = vadd.f32 %v387, %v404
            %v407 = vmax.f32 %v402, %v405
            %v408 = vmax.f32 %v403, %v406
            %409 = vst.msk [vmem:[%s401] sm:$0xff] %vm290, %v407
            %410 = vst.msk [vmem:[%s401 + $0x8] sm:$0xff] %vm290, %v408
          $region65: #{morphology.1} parent=36 // loop_footer
            %s396 = sadd.s32 1, %s392
          $region66: #{morphology.1} parent=36 // loop_footer_branch
            %391 = sbr.rel target = $region62
          $region67: #{morphology.1} parent=36 // loop_exit
            _
          %s411 = sadd.s32 %s390, 1
          loop: start=0, step=1, limit=2
          $region68: #{morphology.1} parent=36 // loop_pre_header
            _
          $region69: #{morphology.1} parent=36 // loop_header
            %s413 = sphi 0, %s417
            %p414 = scmp.ge.s32.totalorder %s413, 2
          $region70: #{morphology.1} parent=36 // loop_header_branch
            %416 = sbr.rel (%p414) target = $region74
          $region71: #{morphology.1} parent=36 // loop_body
            %s418 = smul.u32 %s413, 36
            %s419 = sadd.s32 %s411, %s418
            %s420 = sld [smem:[#allocation4 + %s419]]
            %s421 = smul.u32 %s413, 16
            %s422 = scalar_lea.vmem [#allocation3], %s421
            %v423 = vld [vmem:[%s422] sm:$0xff]
            %v424 = vld [vmem:[%s422 + $0x8] sm:$0xff]
            %v425 = vstv %s420
            %v426 = vadd.f32 %v386, %v425
            %v427 = vadd.f32 %v387, %v425
            %430 = vrot.lane.b32.xlu0 %v426, 127
            %v431 = vpop.permute.xlu0 %430
            %432 = vrot.lane.b32.xlu0 %v427, 127
            %v433 = vpop.permute.xlu0 %432
            %v436 = vmax.f32 %v423, %v431
            %v437 = vmax.f32 %v424, %v433
            %438 = vst.msk [vmem:[%s422] sm:$0xff] %vm290, %v436
            %439 = vst.msk [vmem:[%s422 + $0x8] sm:$0xff] %vm290, %v437
          $region72: #{morphology.1} parent=36 // loop_footer
            %s417 = sadd.s32 1, %s413
          $region73: #{morphology.1} parent=36 // loop_footer_branch
            %412 = sbr.rel target = $region69
          $region74: #{morphology.1} parent=36 // loop_exit
            _
          %s440 = sadd.s32 %s390, 2
          loop: start=0, step=1, limit=2
          $region75: #{morphology.1} parent=36 // loop_pre_header
            _
          $region76: #{morphology.1} parent=36 // loop_header
            %s442 = sphi 0, %s446
            %p443 = scmp.ge.s32.totalorder %s442, 2
          $region77: #{morphology.1} parent=36 // loop_header_branch
            %445 = sbr.rel (%p443) target = $region81
          $region78: #{morphology.1} parent=36 // loop_body
            %s447 = smul.u32 %s442, 36
            %s448 = sadd.s32 %s440, %s447
            %s449 = sld [smem:[#allocation4 + %s448]]
            %s450 = smul.u32 %s442, 16
            %s451 = scalar_lea.vmem [#allocation3], %s450
            %v452 = vld [vmem:[%s451] sm:$0xff]
            %v453 = vld [vmem:[%s451 + $0x8] sm:$0xff]
            %v454 = vstv %s449
            %v455 = vadd.f32 %v386, %v454
            %v456 = vadd.f32 %v387, %v454
            %459 = vrot.lane.b32.xlu0 %v455, 126
            %v460 = vpop.permute.xlu0 %459
            %461 = vrot.lane.b32.xlu0 %v456, 126
            %v462 = vpop.permute.xlu0 %461
            %v465 = vmax.f32 %v452, %v460
            %v466 = vmax.f32 %v453, %v462
            %467 = vst.msk [vmem:[%s451] sm:$0xff] %vm290, %v465
            %468 = vst.msk [vmem:[%s451 + $0x8] sm:$0xff] %vm290, %v466
          $region79: #{morphology.1} parent=36 // loop_footer
            %s446 = sadd.s32 1, %s442
          $region80: #{morphology.1} parent=36 // loop_footer_branch
            %441 = sbr.rel target = $region76
          $region81: #{morphology.1} parent=36 // loop_exit
            _
          %v469 = vld [vmem:[%s302 + $0x2] sm:$0xff]
          %v470 = vld [vmem:[%s302 + $0xa] sm:$0xff]
          %s471 = sadd.s32 %s388, 2
          %s472 = smul.u32 %s471, 3
          loop: start=0, step=1, limit=2
          $region82: #{morphology.1} parent=36 // loop_pre_header
            _
          $region83: #{morphology.1} parent=36 // loop_header
            %s474 = sphi 0, %s478
            %p475 = scmp.ge.s32.totalorder %s474, 2
          $region84: #{morphology.1} parent=36 // loop_header_branch
            %477 = sbr.rel (%p475) target = $region88
          $region85: #{morphology.1} parent=36 // loop_body
            %s479 = smul.u32 %s474, 36
            %s480 = sadd.s32 %s472, %s479
            %s481 = sld [smem:[#allocation4 + %s480]]
            %s482 = smul.u32 %s474, 16
            %s483 = scalar_lea.vmem [#allocation3], %s482
            %v484 = vld [vmem:[%s483] sm:$0xff]
            %v485 = vld [vmem:[%s483 + $0x8] sm:$0xff]
            %v486 = vstv %s481
            %v487 = vadd.f32 %v469, %v486
            %v488 = vadd.f32 %v470, %v486
            %v489 = vmax.f32 %v484, %v487
            %v490 = vmax.f32 %v485, %v488
            %491 = vst.msk [vmem:[%s483] sm:$0xff] %vm290, %v489
            %492 = vst.msk [vmem:[%s483 + $0x8] sm:$0xff] %vm290, %v490
          $region86: #{morphology.1} parent=36 // loop_footer
            %s478 = sadd.s32 1, %s474
          $region87: #{morphology.1} parent=36 // loop_footer_branch
            %473 = sbr.rel target = $region83
          $region88: #{morphology.1} parent=36 // loop_exit
            _
          %s493 = sadd.s32 %s472, 1
          loop: start=0, step=1, limit=2
          $region89: #{morphology.1} parent=36 // loop_pre_header
            _
          $region90: #{morphology.1} parent=36 // loop_header
            %s495 = sphi 0, %s499
            %p496 = scmp.ge.s32.totalorder %s495, 2
          $region91: #{morphology.1} parent=36 // loop_header_branch
            %498 = sbr.rel (%p496) target = $region95
          $region92: #{morphology.1} parent=36 // loop_body
            %s500 = smul.u32 %s495, 36
            %s501 = sadd.s32 %s493, %s500
            %s502 = sld [smem:[#allocation4 + %s501]]
            %s503 = smul.u32 %s495, 16
            %s504 = scalar_lea.vmem [#allocation3], %s503
            %v505 = vld [vmem:[%s504] sm:$0xff]
            %v506 = vld [vmem:[%s504 + $0x8] sm:$0xff]
            %v507 = vstv %s502
            %v508 = vadd.f32 %v469, %v507
            %v509 = vadd.f32 %v470, %v507
            %512 = vrot.lane.b32.xlu0 %v508, 127
            %v513 = vpop.permute.xlu0 %512
            %514 = vrot.lane.b32.xlu0 %v509, 127
            %v515 = vpop.permute.xlu0 %514
            %v518 = vmax.f32 %v505, %v513
            %v519 = vmax.f32 %v506, %v515
            %520 = vst.msk [vmem:[%s504] sm:$0xff] %vm290, %v518
            %521 = vst.msk [vmem:[%s504 + $0x8] sm:$0xff] %vm290, %v519
          $region93: #{morphology.1} parent=36 // loop_footer
            %s499 = sadd.s32 1, %s495
          $region94: #{morphology.1} parent=36 // loop_footer_branch
            %494 = sbr.rel target = $region90
          $region95: #{morphology.1} parent=36 // loop_exit
            _
          %s522 = sadd.s32 %s472, 2
          loop: start=0, step=1, limit=2
          $region96: #{morphology.1} parent=36 // loop_pre_header
            _
          $region97: #{morphology.1} parent=36 // loop_header
            %s524 = sphi 0, %s528
            %p525 = scmp.ge.s32.totalorder %s524, 2
          $region98: #{morphology.1} parent=36 // loop_header_branch
            %527 = sbr.rel (%p525) target = $region102
          $region99: #{morphology.1} parent=36 // loop_body
            %s529 = smul.u32 %s524, 36
            %s530 = sadd.s32 %s522, %s529
            %s531 = sld [smem:[#allocation4 + %s530]]
            %s532 = smul.u32 %s524, 16
            %s533 = scalar_lea.vmem [#allocation3], %s532
            %v534 = vld [vmem:[%s533] sm:$0xff]
            %v535 = vld [vmem:[%s533 + $0x8] sm:$0xff]
            %v536 = vstv %s531
            %v537 = vadd.f32 %v469, %v536
            %v538 = vadd.f32 %v470, %v536
            %541 = vrot.lane.b32.xlu0 %v537, 126
            %v542 = vpop.permute.xlu0 %541
            %543 = vrot.lane.b32.xlu0 %v538, 126
            %v544 = vpop.permute.xlu0 %543
            %v547 = vmax.f32 %v534, %v542
            %v548 = vmax.f32 %v535, %v544
            %549 = vst.msk [vmem:[%s533] sm:$0xff] %vm290, %v547
            %550 = vst.msk [vmem:[%s533 + $0x8] sm:$0xff] %vm290, %v548
          $region100: #{morphology.1} parent=36 // loop_footer
            %s528 = sadd.s32 1, %s524
          $region101: #{morphology.1} parent=36 // loop_footer_branch
            %523 = sbr.rel target = $region97
          $region102: #{morphology.1} parent=36 // loop_exit
            _
        $region37: #{morphology.1} parent=27 // loop_footer
          %s300 = sadd.s32 1, %s296
        $region38: #{morphology.1} parent=27 // loop_footer_branch
          %295 = sbr.rel target = $region34
        $region39: #{morphology.1} parent=27 // loop_exit
          _
        %v551 = vld [vmem:[#allocation3] sm:$0xff]
        %v552 = vld [vmem:[#allocation3 + $0x8] sm:$0xff]
        %vm553 = vcmask 130048
        %554 = vst.msk [vmem:[%s167] sm:$0xff] %vm553, %v551
        %555 = vst.msk [vmem:[%s167 + $0x8] sm:$0xff] %vm553, %v552
        %s556 = scalar_lea.vmem [#allocation3], 16
        %v557 = vld [vmem:[%s556] sm:$0xff]
        %v558 = vld [vmem:[%s556 + $0x8] sm:$0xff]
        %s559 = scalar_lea.vmem %s167, 16 [#allocation7]
        %560 = vst.msk [vmem:[%s559] sm:$0xff] %vm553, %v557
        %561 = vst.msk [vmem:[%s559 + $0x8] sm:$0xff] %vm553, %v558
        %v562 = vld [vmem:[#allocation3] sm:$0xff]
        %v563 = vld [vmem:[#allocation3 + $0x8] sm:$0xff]
        %566 = vrot.lane.b32.xlu0 %v562, 110
        %v567 = vpop.permute.xlu0 %566
        %568 = vrot.lane.b32.xlu0 %v563, 110
        %v569 = vpop.permute.xlu0 %568
        %s572 = scalar_lea.vmem %s167, 32 [#allocation7]
        %573 = vst.msk [vmem:[%s572] sm:$0xff] %vm553, %v567
        %574 = vst.msk [vmem:[%s572 + $0x8] sm:$0xff] %vm553, %v569
        %v575 = vld [vmem:[%s556] sm:$0xff]
        %v576 = vld [vmem:[%s556 + $0x8] sm:$0xff]
        %579 = vrot.lane.b32.xlu0 %v575, 110
        %v580 = vpop.permute.xlu0 %579
        %581 = vrot.lane.b32.xlu0 %v576, 110
        %v582 = vpop.permute.xlu0 %581
        %s585 = scalar_lea.vmem %s167, 48 [#allocation7]
        %586 = vst.msk [vmem:[%s585] sm:$0xff] %vm553, %v580
        %587 = vst.msk [vmem:[%s585 + $0x8] sm:$0xff] %vm553, %v582
        %s588 = sand.u32 %s86, 1
        %s589 = scalar_lea.sflag [#allocation5], %s588
        %s590 = sand.u32 %s86, 1
        %s591 = smul.addr %s590, 64
        %s592 = scalar_lea.vmem [#allocation7], %s591
        // Predicated region
        $region103: #{morphology.1} parent=27 // pred_check
          %p593 = pneg %p96
        $region104: #{morphology.1} parent=27 // pred_check_branch
          %595 = sbr.rel (%p593) target = $region106
        $region105: #{morphology.1} parent=27 // pred_region
          #allocation9 [shape = 'u32[6]{0}', space=smem, size = 0x18, scoped, tag = 'DMA stride descriptor']
          %s596 = smul.u32 2, %s21
          %s597 = smul.u32 2, %s22
          %s599 = ssub.s32 1024, 1024
          %600 = vsyncadd %s589, %s599
          %s601 = smul.addr %s597, 2
          %s602 = smul.addr %s596, 8
          %s603 = sadd.s32 %s601, %s602
          %s604 = smul.addr %s603, 128
          %s605 = scalar_lea.hbm %s2, %s604
          %s607 = sshll.u32 1, 14
          %s608 = sxor.u32 4294967295, %s607
          %s611 = sshll.u32 7, 18
          %s612 = sxor.u32 4294967295, %s611
          %s613 = sand.u32 0, %s612
          %s615 = sor.u32 %s613, 0
          %s617 = sshll.u32 3, 24
          %s618 = sxor.u32 4294967295, %s617
          %s619 = sand.u32 %s615, %s618
          %s621 = sor.u32 %s619, 0
          %s622 = sshll.u32 %s592, 4
          %s623 = int_to_ptr.vmem [resolvable:$true] %s622
          %629 = sst [smem:[#allocation9]] 512
          %s630 = scalar_lea.smem [#allocation9], 1
          %631 = sst [smem:[%s630]] 1024
          %s632 = scalar_lea.smem [#allocation9], 2
          %633 = sst [smem:[%s632]] 4
          %s634 = scalar_lea.smem [#allocation9], 3
          %635 = sst [smem:[%s634]] 128
          %s636 = scalar_lea.smem [#allocation9], 4
          %637 = sst [smem:[%s636]] 128
          %s638 = scalar_lea.smem [#allocation9], 5
          %639 = sst [smem:[%s638]] 8
          %641 = dma.general %s623, 1024, %s605, %s589, [#allocation8], [#allocation9], %s621, 0
        $region106: #{morphology.1} parent=27 // pred_fallthru
          _
      $region28: #{morphology.1} parent=5 // pred_fallthru
        _
      %p642 = scmp.le.s32.totalorder 2, %s12
      // Predicated region
      $region107: #{morphology.1} parent=5 // pred_check
        %p643 = pneg %p642
      $region108: #{morphology.1} parent=5 // pred_check_branch
        %645 = sbr.rel (%p643) target = $region110
      $region109: #{morphology.1} parent=5 // pred_region
        %s646 = ssub.s32 %s12, 2
        // Predicated region
        $region111: #{morphology.1} parent=109 // pred_check
          %p647 = pneg %p102
        $region112: #{morphology.1} parent=109 // pred_check_branch
          %649 = sbr.rel (%p647) target = $region114
        $region113: #{morphology.1} parent=109 // pred_region
          %s650 = sand.u32 %s87, 1
          %s651 = scalar_lea.sflag [#allocation5], %s650
          %s652 = sand.u32 %s87, 1
          %s653 = smul.addr %s652, 64
          %s654 = scalar_lea.vmem [#allocation7], %s653
          %655 = dma.done %s651, 1024
        $region114: #{morphology.1} parent=109 // pred_fallthru
          _
      $region110: #{morphology.1} parent=5 // pred_fallthru
        _
    $region6: #{morphology.1} parent=1 // loop_footer
      %s16 = sadd.s32 1, %s12
    $region7: #{morphology.1} parent=1 // loop_footer_branch
      %11 = sbr.rel target = $region3
    $region8: #{morphology.1} parent=1 // loop_exit
      _
    %656 = vsyncpa [#allocation5], 1
    %s657 = scalar_lea.sflag [#allocation5], 1
    %658 = vsyncpa %s657, 1
    %659 = vsyncpa [#allocation6], 1
    %s660 = scalar_lea.sflag [#allocation6], 1
    %661 = vsyncpa %s660, 1

</llo_original>
